<compile_context>
chip_gen: v6e
topology: v6e:2x2x1
jax: 0.10.0
libtpu: 0.0.40
codegen_flags: <defaults>
</compile_context>

<pallas_src>
import functools

import jax
import jax.numpy as jnp
from jax.experimental import pallas as pl
from jax.experimental.pallas import tpu as pltpu

_NEG = -1e30  # mask value for out-of-range columns; exp(_NEG - max) underflows to 0


def _round_up(n, m):
    return ((n + m - 1) // m) * m


# --------------------------------------------------------------------------
# Single-pass kernel: one column tile spans all B columns (no online rescale).
# --------------------------------------------------------------------------
def _nce_single_tile_kernel(x_ref, lab_row_ref, lab_col_ref, out_ref):
    x = x_ref[...].astype(jnp.float32)                        # (TR, B)
    m = jnp.max(x, axis=1, keepdims=True)                     # (TR, 1)
    e = jnp.exp(x - m)                                        # (TR, B)
    eq = lab_row_ref[...] == lab_col_ref[...]                 # (TR, B) bool
    denom = jnp.sum(e, axis=1, keepdims=True)                 # (TR, 1)
    pos = jnp.sum(jnp.where(eq, e, 0.0), axis=1, keepdims=True)
    # -log(pos) + logsumexp == log(denom / pos); the row max cancels exactly.
    out_ref[...] = jnp.log(denom / pos)


# --------------------------------------------------------------------------
# Streaming online-softmax kernel for B larger than one column tile.
# --------------------------------------------------------------------------
def _make_online_kernel(n_cols, tc):
    ragged = (n_cols % tc) != 0  # static: emit edge-mask code only if needed

    def kernel(x_ref, lab_row_ref, lab_col_ref, out_ref, m_sc, denom_sc, pos_sc):
        j = pl.program_id(1)

        @pl.when(j == 0)
        def _():
            m_sc[...] = jnp.full(m_sc.shape, -jnp.inf, m_sc.dtype)
            denom_sc[...] = jnp.zeros(denom_sc.shape, denom_sc.dtype)
            pos_sc[...] = jnp.zeros(pos_sc.shape, pos_sc.dtype)

        x = x_ref[...].astype(jnp.float32)                    # (TR, TC)

        if ragged:
            # Mask columns >= B (only the last column tile has any); masking x
            # before the max makes exp underflow to exactly 0 there, so both
            # denom and pos_sum are unaffected regardless of stale label data.
            col = jax.lax.broadcasted_iota(jnp.int32, (1, tc), 1) + j * tc
            x = jnp.where(col < n_cols, x, _NEG)

        # Online (flash-style) rescale: exact because the running max cancels
        # in the final log(denom / pos_sum) ratio.
        tile_max = jnp.max(x, axis=1, keepdims=True)          # (TR, 1)
        m_new = jnp.maximum(m_sc[...], tile_max)              # (TR, 1)
        rescale = jnp.exp(m_sc[...] - m_new)                  # (TR, 1)
        e = jnp.exp(x - m_new)                                # (TR, TC)

        eq = lab_row_ref[...] == lab_col_ref[...]             # (TR, TC) bool
        e_pos = jnp.where(eq, e, 0.0)

        denom_sc[...] = denom_sc[...] * rescale + jnp.sum(e, axis=1, keepdims=True)
        pos_sc[...] = pos_sc[...] * rescale + jnp.sum(e_pos, axis=1, keepdims=True)
        m_sc[...] = m_new

        @pl.when(j == pl.num_programs(1) - 1)
        def _():
            out_ref[...] = jnp.log(denom_sc[...] / pos_sc[...])

    return kernel


@functools.partial(jax.jit, static_argnames=("tr", "tc"))
def nce_softmax_loss(x, labels, *, tr=None, tc=None):
    """x: (B, B) similarity matrix (f32 or bf16); labels: (B,) integer labels."""
    B = x.shape[0]
    labels = labels.astype(jnp.int32)
    lab_row = labels.reshape(B, 1)
    lab_col = labels.reshape(1, B)

    itemsize = jnp.dtype(x.dtype).itemsize

    # ---- column tile selection ------------------------------------------
    tc_default = tc if tc is not None else (2048 if itemsize >= 4 else 4096)
    if tc_default >= B:
        tc_eff = B                                  # single full-width tile
    else:
        assert tc_default % 128 == 0, "tc override must be a multiple of 128"
        n = pl.cdiv(B, tc_default)
        # balance so the last tile isn't mostly empty
        tc_eff = min(_round_up(pl.cdiv(B, n), 128), tc_default)

    # ---- row tile selection ----------------------------------------------
    tr_default = tr if tr is not None else 256
    if tr_default >= B:
        tr_eff = B
    else:
        assert tr_default % 8 == 0, "tr override must be a multiple of 8"
        n = pl.cdiv(B, tr_default)
        tr_eff = min(_round_up(pl.cdiv(B, n), 16), tr_default)

    n_row_tiles = pl.cdiv(B, tr_eff)
    n_col_tiles = pl.cdiv(B, tc_eff)

    cost = pl.CostEstimate(
        flops=int(5 * B * B),
        transcendentals=int(B * B + B),
        bytes_accessed=int(B * B * itemsize + 4 * 2 * B + 4 * B),
    )
    compiler_params_kwargs = dict(vmem_limit_bytes=32 * 1024 * 1024)

    if n_col_tiles == 1:
        # Full-row single-pass kernel (no online-softmax bookkeeping).
        per_row = pl.pallas_call(
            _nce_single_tile_kernel,
            out_shape=jax.ShapeDtypeStruct((B, 1), jnp.float32),
            grid_spec=pltpu.PrefetchScalarGridSpec(
                num_scalar_prefetch=0,
                grid=(n_row_tiles,),
                in_specs=[
                    pl.BlockSpec((tr_eff, B), lambda i: (i, 0)),   # x row slab
                    pl.BlockSpec((tr_eff, 1), lambda i: (i, 0)),   # row labels
                    pl.BlockSpec((1, B), lambda i: (0, 0)),        # col labels
                ],
                out_specs=pl.BlockSpec((tr_eff, 1), lambda i: (i, 0)),
            ),
            compiler_params=pltpu.CompilerParams(
                dimension_semantics=("parallel",),
                **compiler_params_kwargs,
            ),
            cost_estimate=cost,
        )(x, lab_row, lab_col)
    else:
        kernel = _make_online_kernel(B, tc_eff)
        per_row = pl.pallas_call(
            kernel,
            out_shape=jax.ShapeDtypeStruct((B, 1), jnp.float32),
            grid_spec=pltpu.PrefetchScalarGridSpec(
                num_scalar_prefetch=0,
                grid=(n_row_tiles, n_col_tiles),    # reduction axis last
                in_specs=[
                    pl.BlockSpec((tr_eff, tc_eff), lambda i, j: (i, j)),  # x tile
                    pl.BlockSpec((tr_eff, 1), lambda i, j: (i, 0)),       # row labels
                    pl.BlockSpec((1, tc_eff), lambda i, j: (0, j)),       # col labels
                ],
                out_specs=pl.BlockSpec((tr_eff, 1), lambda i, j: (i, 0)),
                scratch_shapes=[
                    pltpu.VMEM((tr_eff, 1), jnp.float32),  # running row max
                    pltpu.VMEM((tr_eff, 1), jnp.float32),  # running denominator
                    pltpu.VMEM((tr_eff, 1), jnp.float32),  # running positive sum
                ],
            ),
            compiler_params=pltpu.CompilerParams(
                dimension_semantics=("parallel", "arbitrary"),
                **compiler_params_kwargs,
            ),
            cost_estimate=cost,
        )(x, lab_row, lab_col)

    # Tiny final mean over the B per-row losses in plain JAX.
    return jnp.mean(per_row[:, 0])


def nce_softmax_loss_ref(x, labels):
    """Pure-JAX reference matching the PyTorch forward."""
    pos_mask = (labels[:, None] == labels[None, :]).astype(jnp.float32)
    pos = jnp.sum(jnp.exp(x) * pos_mask, axis=1)
    lse = jax.scipy.special.logsumexp(x, axis=1)
    return jnp.mean(-jnp.log(pos) + lse)


if __name__ == "__main__":
    # Small f32 case (single-pass path).
    kx, kl = jax.random.split(jax.random.PRNGKey(0))
    B = 8
    x = jax.random.normal(kx, (B, B), dtype=jnp.float32)
    labels = jax.random.randint(kl, (B,), 0, 4, dtype=jnp.int32)
    loss = jax.block_until_ready(nce_softmax_loss(x, labels))
    ref = nce_softmax_loss_ref(x, labels)
    assert jnp.allclose(loss, ref, rtol=1e-5, atol=1e-5), (loss, ref)

    # Non-tile-multiple B with bf16 input (native-dtype DMA, full-dim blocks).
    kx2, kl2 = jax.random.split(jax.random.PRNGKey(1))
    B2 = 20
    x2 = jax.random.normal(kx2, (B2, B2), dtype=jnp.bfloat16)
    labels2 = jax.random.randint(kl2, (B2,), 0, 5, dtype=jnp.int32)
    loss2 = jax.block_until_ready(nce_softmax_loss(x2, labels2))
    ref2 = nce_softmax_loss_ref(x2.astype(jnp.float32), labels2)
    assert jnp.allclose(loss2, ref2, rtol=1e-3, atol=1e-3), (loss2, ref2)

    # Force the streaming online-softmax path with ragged row AND column edges
    # (300 % 128 != 0, 300 % 32 != 0) via small tile overrides.
    kx3, kl3 = jax.random.split(jax.random.PRNGKey(2))
    B3 = 300
    x3 = jax.random.normal(kx3, (B3, B3), dtype=jnp.float32)
    labels3 = jax.random.randint(kl3, (B3,), 0, 7, dtype=jnp.int32)
    loss3 = jax.block_until_ready(nce_softmax_loss(x3, labels3, tr=32, tc=128))
    ref3 = nce_softmax_loss_ref(x3, labels3)
    assert jnp.allclose(loss3, ref3, rtol=1e-5, atol=1e-5), (loss3, ref3)

    print("KERNEL_OK")
</pallas_src>

<mosaic_0001>
module attributes {stable_mosaic.version = 11 : i64} {
  func.func @_nce_single_tile_kernel(%arg0: i32, %arg1: memref<8x8xf32, #tpu.memory_space<vmem>>, %arg2: memref<8x1xi32, #tpu.memory_space<vmem>>, %arg3: memref<1x8xi32, #tpu.memory_space<vmem>>, %arg4: memref<8x1xf32, #tpu.memory_space<vmem>>) attributes {dimension_semantics = [#tpu.dimension_semantics<parallel>], iteration_bounds = array<i64: 1>, scalar_prefetch = 0 : i64, scratch_operands = 0 : i64, tpu.core_type = #tpu.core_type<tc>, window_params = [{transform_indices = @transform_0, window_bounds = array<i64: 8, 8>}, {transform_indices = @transform_1, window_bounds = array<i64: 8, 1>}, {pipeline_mode = #tpu.pipeline_mode<synchronous>, transform_indices = @transform_2, window_bounds = array<i64: 1, 8>}, {transform_indices = @transform_3, window_bounds = array<i64: 8, 1>}]} {
    %c0 = arith.constant 0 : index
    %c0_0 = arith.constant 0 : index
    %0 = vector.load %arg1[%c0, %c0_0] : memref<8x8xf32, #tpu.memory_space<vmem>>, vector<8x8xf32>
    %cst = arith.constant dense<0xFF800000> : vector<8xf32>
    %1 = vector.multi_reduction <maximumf>, %0, %cst [1] : vector<8x8xf32> to vector<8xf32>
    %2 = vector.shape_cast %1 : vector<8xf32> to vector<8x1xf32>
    %3 = vector.broadcast %2 : vector<8x1xf32> to vector<8x8xf32>
    %4 = arith.subf %0, %3 : vector<8x8xf32>
    %5 = math.exp %4 : vector<8x8xf32>
    %c0_1 = arith.constant 0 : index
    %c0_2 = arith.constant 0 : index
    %6 = vector.load %arg2[%c0_1, %c0_2] : memref<8x1xi32, #tpu.memory_space<vmem>>, vector<8x1xi32>
    %c0_3 = arith.constant 0 : index
    %c0_4 = arith.constant 0 : index
    %7 = vector.load %arg3[%c0_3, %c0_4] : memref<1x8xi32, #tpu.memory_space<vmem>>, vector<1x8xi32>
    %8 = vector.broadcast %6 : vector<8x1xi32> to vector<8x8xi32>
    %9 = vector.broadcast %7 : vector<1x8xi32> to vector<8x8xi32>
    %10 = arith.cmpi eq, %8, %9 : vector<8x8xi32>
    %cst_5 = arith.constant dense<0.000000e+00> : vector<8xf32>
    %11 = vector.multi_reduction <add>, %5, %cst_5 [1] : vector<8x8xf32> to vector<8xf32>
    %12 = vector.shape_cast %11 : vector<8xf32> to vector<8x1xf32>
    %cst_6 = arith.constant 0.000000e+00 : f32
    %13 = vector.broadcast %cst_6 : f32 to vector<8x8xf32>
    %14 = arith.select %10, %5, %13 : vector<8x8xi1>, vector<8x8xf32>
    %cst_7 = arith.constant dense<0.000000e+00> : vector<8xf32>
    %15 = vector.multi_reduction <add>, %14, %cst_7 [1] : vector<8x8xf32> to vector<8xf32>
    %16 = vector.shape_cast %15 : vector<8xf32> to vector<8x1xf32>
    %17 = arith.divf %12, %16 : vector<8x1xf32>
    %18 = math.log %17 : vector<8x1xf32>
    %c0_8 = arith.constant 0 : index
    %c0_9 = arith.constant 0 : index
    %19 = vector.load %arg4[%c0_8, %c0_9] : memref<8x1xf32, #tpu.memory_space<vmem>>, vector<8x1xf32>
    tpu.vector_store %arg4[%c0_8, %c0_9], %18 {strides = array<i32>} : memref<8x1xf32, #tpu.memory_space<vmem>>, vector<8x1xf32>,
    return
  }
  func.func @transform_0(%arg0: i32) -> (i32, i32) {
    %c0_i32 = arith.constant 0 : i32
    %c0_i32_0 = arith.constant 0 : i32
    return %arg0, %c0_i32 : i32, i32
  }
  func.func @transform_1(%arg0: i32) -> (i32, i32) {
    %c0_i32 = arith.constant 0 : i32
    %c0_i32_0 = arith.constant 0 : i32
    return %arg0, %c0_i32 : i32, i32
  }
  func.func @transform_2(%arg0: i32) -> (i32, i32) {
    %c0_i32 = arith.constant 0 : i32
    %c0_i32_0 = arith.constant 0 : i32
    %c0_i32_1 = arith.constant 0 : i32
    return %c0_i32, %c0_i32_0 : i32, i32
  }
  func.func @transform_3(%arg0: i32) -> (i32, i32) {
    %c0_i32 = arith.constant 0 : i32
    %c0_i32_0 = arith.constant 0 : i32
    return %arg0, %c0_i32 : i32, i32
  }
}

</mosaic_0001>

<llo_original>
// kernel: nce_softmax_loss.1
$region0: #{nce_softmax_loss.1}
  #allocation0 [shape = 'u32[]', space=smem, size = 0x4, offset = 0x4, fixed_abs, tag = 'smem constant byte address 0x4 - core index']
  #allocation1 [shape = 'u32[144,128]{1,0:T(1,128)}', space=vmem, size = 0x12000, scoped, tag = 'internal scratch']
  %s0 = inlined_call_operand.vmem [shape: f32[8,8], index: 0, kind: input, shape index: {}]
  %s1 = inlined_call_operand.vmem [shape: s32[8,1], index: 1, kind: input, shape index: {}]
  %s2 = inlined_call_operand.vmem [shape: s32[1,8], index: 2, kind: input, shape index: {}]
  %s3 = inlined_call_operand.vmem [shape: f32[8,1], index: 3, kind: output, shape index: {}]
  %s4 = sld [smem:[#allocation0]]
  $region22: #{nce_softmax_loss.1} parent=0
    _
  %s6 = ssub.s32 1, %s4
  %s7 = scalar_select 0, %s6, %s4
  // Predicated region
  $region2: #{nce_softmax_loss.1} parent=0 // pred_check
    _
  $region3: #{nce_softmax_loss.1} parent=0 // pred_check_branch
    %9 = sbr.rel (0) target = $region5
  $region4: #{nce_softmax_loss.1} parent=0 // pred_region
    _
  $region5: #{nce_softmax_loss.1} parent=0 // pred_fallthru
    _
  // Predicated region
  $region6: #{nce_softmax_loss.1} parent=0 // pred_check
    _
  $region7: #{nce_softmax_loss.1} parent=0 // pred_check_branch
    %11 = sbr.rel (0) target = $region9
  $region8: #{nce_softmax_loss.1} parent=0 // pred_region
    _
  $region9: #{nce_softmax_loss.1} parent=0 // pred_fallthru
    _
  // Predicated region
  $region10: #{nce_softmax_loss.1} parent=0 // pred_check
    _
  $region11: #{nce_softmax_loss.1} parent=0 // pred_check_branch
    %13 = sbr.rel (0) target = $region13
  $region12: #{nce_softmax_loss.1} parent=0 // pred_region
    _
  $region13: #{nce_softmax_loss.1} parent=0 // pred_fallthru
    _
  %v14 = vld [vmem:[%s0] sm:$0xff]
  %vm15 = vcmask 64512
  %v16 = vsel %vm15, %v14, -inf
  %17 = vmax.xlane.f32.xlu0 %v16
  %v18 = vpop.xlane.xlu0 %17
  %v19 = vsub.f32 %v14, %v18
  %v20 = vmul.f32 %v19, 1.442695
  %v21 = vpow.pop %v20
  %v22 = vld [vmem:[%s1] sm:$0xff]
  %v23 = vld [vmem:[%s2] sm:$0x1]
  %24 = vset.pattern.permute.xlu0 0
  %25 = vperm.xlu0 %24, %v22
  %v26 = vpop.permute.xlu0 %25
  %v27 = vlaneseq
  %v28 = vshrl.u32 %v27, 7
  %v29 = vsub.s32 0, %v28
  %v30 = vrot.slane %v23, %v29
  %vm31 = vcmp.eq.s32.totalorder %v26, %v30
  %v32 = vsel %vm15, %v21, 0.0
  %33 = vadd.xlane.f32.xlu0 %v32
  %v34 = vpop.xlane.xlu0 %33
  %v35 = vsel %vm31, %v21, 0.0
  %v36 = vsel %vm15, %v35, 0.0
  %37 = vadd.xlane.f32.xlu0 %v36
  %v38 = vpop.xlane.xlu0 %37
  %v39 = vrcp.pop %v38
  %v40 = vmul.f32 %v34, %v39
  %v41 = vlog2.pop %v40
  %v42 = vmul.f32 %v41, 0.6931472
  %vm43 = vcmask 7168
  %44 = vst.msk [vmem:[%s3] sm:$0xff] %vm43, %v42
  // Predicated region
  $region14: #{nce_softmax_loss.1} parent=0 // pred_check
    _
  $region15: #{nce_softmax_loss.1} parent=0 // pred_check_branch
    %46 = sbr.rel (0) target = $region17
  $region16: #{nce_softmax_loss.1} parent=0 // pred_region
    _
  $region17: #{nce_softmax_loss.1} parent=0 // pred_fallthru
    _
  // Predicated region
  $region18: #{nce_softmax_loss.1} parent=0 // pred_check
    _
  $region19: #{nce_softmax_loss.1} parent=0 // pred_check_branch
    %48 = sbr.rel (0) target = $region21
  $region20: #{nce_softmax_loss.1} parent=0 // pred_region
    _
  $region21: #{nce_softmax_loss.1} parent=0 // pred_fallthru
    _

</llo_original>
